<compile_context>
chip_gen: v7x
topology: tpu7x:2x2x1
jax: 0.10.0
libtpu: 0.0.40
codegen_flags: <defaults>
</compile_context>

<pallas_src>
import functools

import jax
import jax.numpy as jnp
from jax.experimental import pallas as pl
from jax.experimental.pallas import tpu as pltpu

NEG_SLOPE = 0.01          # nn.LeakyReLU default
LOGSCALE_FACTOR = 3.0     # Conv1dZeros logscale factor (Glow convention)


# ----------------------------------------------------------------------------
# Pallas kernel
# ----------------------------------------------------------------------------
def _conv3_one_matmul(x, w_stk, b, first_col, last_col, n, matmul_dtype):
    """Conv1d, kernel_size=3, padding=1 (cross-correlation) as a single matmul.

    x: (Cin, N) f32, w_stk: (Cout, 3*Cin), b: (Cout, 1) f32.
    first_col/last_col: (1, N) bool masks marking per-segment boundaries
    (the batch is folded along lanes, so zero-padding is per S-segment).
    """
    xl = jnp.where(first_col, 0.0, pltpu.roll(x, shift=1, axis=1))      # x[:, s-1]
    xr = jnp.where(last_col, 0.0, pltpu.roll(x, shift=n - 1, axis=1))   # x[:, s+1]
    xs = jnp.concatenate([xl, x, xr], axis=0).astype(matmul_dtype)      # (3*Cin, N)
    return jnp.dot(w_stk, xs, preferred_element_type=jnp.float32) + b


def flowstep_kernel(x_ref,
                    wp_ref, c_ref,             # fused actnorm+1x1:  (C,C), (C,1)
                    w1_ref, b1_ref,            # conv1  (H, 3*half), (H,1)
                    w2_ref, b2_ref,            # conv2  (H, 3*H),    (H,1)
                    w3_ref, b3_ref, s3_ref,    # conv3  (half, 3*H), (half,1), exp(l3*3) (half,1)
                    out_ref,
                    *, seg_len, half, matmul_dtype):
    x = x_ref[...].astype(jnp.float32)           # (C, N) = (C, Bt*S)
    n = x.shape[1]

    # --- fused ActNorm + invertible 1x1 conv: z = W' @ x + c ---
    z = jnp.dot(wp_ref[...], x.astype(matmul_dtype),
                preferred_element_type=jnp.float32) + c_ref[...]

    # --- split_channel(z, 'simple') ---
    z1 = z[:half]
    z2 = z[half:]

    # Per-segment boundary masks, built once and reused by all three convs.
    col = jax.lax.broadcasted_iota(jnp.int32, (1, n), 1)
    seg = col % seg_len
    first_col = seg == 0
    last_col = seg == seg_len - 1

    # --- NN(z1): conv -> leaky_relu -> conv -> leaky_relu -> conv_zeros ---
    h = _conv3_one_matmul(z1, w1_ref[...], b1_ref[...], first_col, last_col, n, matmul_dtype)
    h = jnp.where(h >= 0, h, NEG_SLOPE * h)
    h = _conv3_one_matmul(h, w2_ref[...], b2_ref[...], first_col, last_col, n, matmul_dtype)
    h = jnp.where(h >= 0, h, NEG_SLOPE * h)
    h = _conv3_one_matmul(h, w3_ref[...], b3_ref[...], first_col, last_col, n, matmul_dtype)
    h = h * s3_ref[...]                          # precomputed exp(l3 * 3)

    # --- additive coupling; write both halves directly (no concatenate) ---
    out_ref[:half, :] = z1.astype(out_ref.dtype)
    out_ref[half:, :] = (z2 + h).astype(out_ref.dtype)


# ----------------------------------------------------------------------------
# Wrapper
# ----------------------------------------------------------------------------
def _choose_block_batch(B, S, C, H):
    """How many batch elements to fold into each (C, Bt*S) block."""
    lane_target = 512          # want at least a few vregs of lanes per matmul
    bytes_cap = 4 << 20        # keep the f32 activation footprint modest (v7x: 64 MiB VMEM)
    per_batch = 4 * S * (2 * C + 3 * max(C, H) + 2 * H)   # rough per-batch activation bytes
    bt = max(1, min(B, bytes_cap // max(per_batch, 1)))
    # Prefer >= 2 grid steps (v7x has two TensorCores) as long as the lane
    # width does not drop below the target.
    while bt > 1 and B // bt < 2 and (bt // 2) * S >= lane_target:
        bt //= 2
    while B % bt:
        bt -= 1
    return bt


def flow_step_forward(x, params, logdet, *, matmul_dtype=jnp.float32,
                      block_batch=None):
    """x: (B, C, S) float32.  Returns (z, logdet) matching FlowStep.forward."""
    B, C, S = x.shape
    half = C // 2
    H = params["w1"].shape[1]

    # ---- parameter-only algebra, hoisted out of the kernel ----
    # Fold ActNorm into the 1x1 conv:  W' = W * exp(logs)[None,:],  c = W' @ bias.
    wp = params["w_inv"] * jnp.exp(params["a_logs"])[None, :]
    cvec = (wp @ params["a_bias"]).reshape(C, 1)
    # Stack the three conv taps along the contraction axis: (3,Cout,Cin)->(Cout,3*Cin).
    stack = lambda w: jnp.transpose(w, (1, 0, 2)).reshape(w.shape[1], 3 * w.shape[2])
    w1s, w2s, w3s = stack(params["w1"]), stack(params["w2"]), stack(params["w3"])
    s3 = jnp.exp(params["l3"] * LOGSCALE_FACTOR).reshape(half, 1)
    # Matmul operands may be bf16 on v6e/v7x (f32 accumulate); elementwise stays f32.
    wp, w1s, w2s, w3s = (w.astype(matmul_dtype) for w in (wp, w1s, w2s, w3s))

    # ---- fold batch into the lane axis: (B, C, S) -> (C, B*S) ----
    x_slab = jnp.transpose(x, (1, 0, 2)).reshape(C, B * S)
    Bt = block_batch if block_batch is not None else _choose_block_batch(B, S, C, H)
    assert B % Bt == 0
    N = Bt * S
    grid = (B // Bt,)

    full2d = lambda shp: pl.BlockSpec(shp, lambda i: (0, 0))
    kernel = functools.partial(flowstep_kernel, seg_len=S, half=half,
                               matmul_dtype=matmul_dtype)

    # TODO(synk): for very large S, tile the lane axis with a 1-sample halo and set
    # vmem_limit_bytes explicitly (v7x scoped VMEM is half of v6e's).
    z_slab = pl.pallas_call(
        kernel,
        out_shape=jax.ShapeDtypeStruct((C, B * S), x.dtype),
        grid_spec=pltpu.PrefetchScalarGridSpec(
            num_scalar_prefetch=0,
            grid=grid,
            in_specs=[
                pl.BlockSpec((C, N), lambda i: (0, i)),       # x slab
                full2d((C, C)), full2d((C, 1)),               # fused actnorm + 1x1
                full2d((H, 3 * half)), full2d((H, 1)),        # conv1
                full2d((H, 3 * H)), full2d((H, 1)),           # conv2
                full2d((half, 3 * H)), full2d((half, 1)),     # conv3 (Conv1dZeros)
                full2d((half, 1)),                            # exp(l3 * 3)
            ],
            out_specs=pl.BlockSpec((C, N), lambda i: (0, i)),
        ),
        compiler_params=pltpu.CompilerParams(
            dimension_semantics=("parallel",)),
    )(x_slab, wp, cvec,
      w1s, params["b1"].reshape(H, 1),
      w2s, params["b2"].reshape(H, 1),
      w3s, params["b3"].reshape(half, 1),
      s3)

    z = jnp.transpose(z_slab.reshape(C, B, S), (1, 0, 2))

    # logdet is parameter-only (data independent); additive coupling adds nothing.
    sld = jnp.linalg.slogdet(params["w_inv"])[1]
    logdet = logdet + S * jnp.sum(params["a_logs"]) + S * sld
    return z, logdet


# ----------------------------------------------------------------------------
# Pure-JAX reference (for numerical check)
# ----------------------------------------------------------------------------
def _ref_conv1d(x, w, b):
    # x: (B, Cin, S), w: (3, Cout, Cin), b: (Cout,)
    S = x.shape[-1]
    xp = jnp.pad(x, ((0, 0), (0, 0), (1, 1)))
    y = sum(jnp.einsum("oi,bis->bos", w[k], xp[:, :, k:k + S],
                       precision=jax.lax.Precision.HIGHEST) for k in range(3))
    return y + b[None, :, None]


def ref_forward(x, params, logdet):
    B, C, S = x.shape
    half = C // 2
    z = (x + params["a_bias"][None, :, None]) * jnp.exp(params["a_logs"])[None, :, None]
    z = jnp.einsum("oc,bcs->bos", params["w_inv"], z,
                   precision=jax.lax.Precision.HIGHEST)
    z1, z2 = z[:, :half], z[:, half:]
    h = _ref_conv1d(z1, params["w1"], params["b1"])
    h = jnp.where(h >= 0, h, NEG_SLOPE * h)
    h = _ref_conv1d(h, params["w2"], params["b2"])
    h = jnp.where(h >= 0, h, NEG_SLOPE * h)
    h = _ref_conv1d(h, params["w3"], params["b3"])
    h = h * jnp.exp(params["l3"] * LOGSCALE_FACTOR)[None, :, None]
    z = jnp.concatenate([z1, z2 + h], axis=1)
    logdet = logdet + S * jnp.sum(params["a_logs"]) + S * jnp.linalg.slogdet(params["w_inv"])[1]
    return z, logdet


# ----------------------------------------------------------------------------
# Deterministic parameter construction (shapes from FlowStep.__init__)
# ----------------------------------------------------------------------------
def _weight_norm(v):
    # PyTorch weight_norm(dim=0) with g initialised to ||v|| -> effective weight == v,
    # folded here into a single effective weight tensor.
    norm = jnp.sqrt(jnp.sum(v * v, axis=(1, 2), keepdims=True))
    g = norm
    return g * v / norm


def make_params(key, in_channels, hidden_channels):
    half = in_channels // 2
    ks = jax.random.split(key, 10)
    a_bias = 0.1 * jax.random.normal(ks[0], (in_channels,), jnp.float32)
    a_logs = 0.1 * jax.random.normal(ks[1], (in_channels,), jnp.float32)
    # Invertible 1x1 conv: random rotation (orthogonal init, like Glow).
    w_inv = jnp.linalg.qr(jax.random.normal(ks[2], (in_channels, in_channels),
                                            jnp.float32))[0]
    # weight-normed Conv1d layers (kernel_size=3, padding=1)
    v1 = 0.05 * jax.random.normal(ks[3], (hidden_channels, half, 3), jnp.float32)
    v2 = 0.05 * jax.random.normal(ks[4], (hidden_channels, hidden_channels, 3), jnp.float32)
    b1 = 0.05 * jax.random.normal(ks[5], (hidden_channels,), jnp.float32)
    b2 = 0.05 * jax.random.normal(ks[6], (hidden_channels,), jnp.float32)
    w1 = _weight_norm(v1)
    w2 = _weight_norm(v2)
    # Conv1dZeros is zero-initialised in Glow; small non-zero values are used here
    # so the test exercises the full coupling path (the kernel handles any values).
    w3 = 0.05 * jax.random.normal(ks[7], (half, hidden_channels, 3), jnp.float32)
    b3 = 0.05 * jax.random.normal(ks[8], (half,), jnp.float32)
    l3 = 0.05 * jax.random.normal(ks[9], (half,), jnp.float32)
    # Kernel layout: weights as (K, Cout, Cin) so the tap index is the leading dim.
    to_k_first = lambda w: jnp.transpose(w, (2, 0, 1))
    return {
        "a_bias": a_bias, "a_logs": a_logs, "w_inv": w_inv,
        "w1": to_k_first(w1), "b1": b1,
        "w2": to_k_first(w2), "b2": b2,
        "w3": to_k_first(w3), "b3": b3, "l3": l3,
    }


# TODO(synk): coupling='affine' (Rescale + sigmoid scale + per-sample logdet) is not
# exercised here since the module default is coupling='additive'.

if __name__ == "__main__":
    B, C, S, H = 2, 8, 128, 32   # Nb x Nc x Ns, hidden_channels = 32
    key = jax.random.PRNGKey(0)
    kx, kp = jax.random.split(key)
    x = jax.random.normal(kx, (B, C, S), jnp.float32)
    logdet0 = jnp.zeros((B,), jnp.float32)
    params = make_params(kp, C, H)

    # f32 matmul operands here for a tight check; pass matmul_dtype=jnp.bfloat16
    # on v6e/v7x for the MXU/bandwidth win (f32 accumulation either way).
    z, logdet = flow_step_forward(x, params, logdet0)
    z = jax.block_until_ready(z)
    logdet = jax.block_until_ready(logdet)

    z_ref, logdet_ref = ref_forward(x, params, logdet0)
    assert z.shape == (B, C, S) and logdet.shape == (B,)
    assert jnp.allclose(z, z_ref, atol=2e-3, rtol=2e-3), "output mismatch"
    assert jnp.allclose(logdet, logdet_ref, atol=2e-3, rtol=2e-3), "logdet mismatch"
    print("KERNEL_OK")
</pallas_src>

<mosaic_0001>
module attributes {stable_mosaic.version = 11 : i64} {
  func.func @flowstep_kernel(%arg0: i32, %arg1: memref<8x256xf32, #tpu.memory_space<vmem>>, %arg2: memref<8x8xf32, #tpu.memory_space<vmem>>, %arg3: memref<8x1xf32, #tpu.memory_space<vmem>>, %arg4: memref<32x12xf32, #tpu.memory_space<vmem>>, %arg5: memref<32x1xf32, #tpu.memory_space<vmem>>, %arg6: memref<32x96xf32, #tpu.memory_space<vmem>>, %arg7: memref<32x1xf32, #tpu.memory_space<vmem>>, %arg8: memref<4x96xf32, #tpu.memory_space<vmem>>, %arg9: memref<4x1xf32, #tpu.memory_space<vmem>>, %arg10: memref<4x1xf32, #tpu.memory_space<vmem>>, %arg11: memref<8x256xf32, #tpu.memory_space<vmem>>) attributes {dimension_semantics = [#tpu.dimension_semantics<parallel>], iteration_bounds = array<i64: 1>, scalar_prefetch = 0 : i64, scratch_operands = 0 : i64, tpu.core_type = #tpu.core_type<tc>, window_params = [{transform_indices = @transform_0, window_bounds = array<i64: 8, 256>}, {pipeline_mode = #tpu.pipeline_mode<synchronous>, transform_indices = @transform_1, window_bounds = array<i64: 8, 8>}, {pipeline_mode = #tpu.pipeline_mode<synchronous>, transform_indices = @transform_2, window_bounds = array<i64: 8, 1>}, {pipeline_mode = #tpu.pipeline_mode<synchronous>, transform_indices = @transform_3, window_bounds = array<i64: 32, 12>}, {pipeline_mode = #tpu.pipeline_mode<synchronous>, transform_indices = @transform_4, window_bounds = array<i64: 32, 1>}, {pipeline_mode = #tpu.pipeline_mode<synchronous>, transform_indices = @transform_5, window_bounds = array<i64: 32, 96>}, {pipeline_mode = #tpu.pipeline_mode<synchronous>, transform_indices = @transform_6, window_bounds = array<i64: 32, 1>}, {pipeline_mode = #tpu.pipeline_mode<synchronous>, transform_indices = @transform_7, window_bounds = array<i64: 4, 96>}, {pipeline_mode = #tpu.pipeline_mode<synchronous>, transform_indices = @transform_8, window_bounds = array<i64: 4, 1>}, {pipeline_mode = #tpu.pipeline_mode<synchronous>, transform_indices = @transform_9, window_bounds = array<i64: 4, 1>}, {transform_indices = @transform_10, window_bounds = array<i64: 8, 256>}]} {
    %c0 = arith.constant 0 : index
    %c0_0 = arith.constant 0 : index
    %0 = vector.load %arg1[%c0, %c0_0] : memref<8x256xf32, #tpu.memory_space<vmem>>, vector<8x256xf32>
    %c0_1 = arith.constant 0 : index
    %c0_2 = arith.constant 0 : index
    %1 = vector.load %arg2[%c0_1, %c0_2] : memref<8x8xf32, #tpu.memory_space<vmem>>, vector<8x8xf32>
    %cst = arith.constant dense<0.000000e+00> : vector<8x256xf32>
    %2 = tpu.matmul %1, %0, %cst {dimension_numbers = #tpu.dot_dimension_numbers<[1], [0], [0], [1], [0, 0, 1, 1], [], []>} : vector<8x8xf32>, vector<8x256xf32>, vector<8x256xf32> -> vector<8x256xf32>
    %c0_3 = arith.constant 0 : index
    %c0_4 = arith.constant 0 : index
    %3 = vector.load %arg3[%c0_3, %c0_4] : memref<8x1xf32, #tpu.memory_space<vmem>>, vector<8x1xf32>
    %4 = vector.broadcast %3 : vector<8x1xf32> to vector<8x256xf32>
    %5 = arith.addf %2, %4 : vector<8x256xf32>
    %6 = vector.extract_strided_slice %5 {offsets = [0, 0], sizes = [4, 256], strides = [1, 1]} : vector<8x256xf32> to vector<4x256xf32>
    %7 = vector.extract_strided_slice %5 {offsets = [4, 0], sizes = [4, 256], strides = [1, 1]} : vector<8x256xf32> to vector<4x256xf32>
    %8 = tpu.iota {dimensions = array<i32: 1>} : vector<1x256xi32>
    %c128_i32 = arith.constant 128 : i32
    %c0_i32 = arith.constant 0 : i32
    %9 = arith.cmpi eq, %c128_i32, %c0_i32 : i32
    %c1_i32 = arith.constant 1 : i32
    %10 = arith.select %9, %c1_i32, %c128_i32 : i32
    %11 = vector.broadcast %10 : i32 to vector<1x256xi32>
    %12 = arith.remsi %8, %11 : vector<1x256xi32>
    %c0_i32_5 = arith.constant 0 : i32
    %13 = vector.broadcast %c0_i32_5 : i32 to vector<1x256xi32>
    %14 = arith.cmpi ne, %12, %13 : vector<1x256xi32>
    %c0_i32_6 = arith.constant 0 : i32
    %15 = vector.broadcast %c0_i32_6 : i32 to vector<1x256xi32>
    %16 = arith.cmpi slt, %12, %15 : vector<1x256xi32>
    %c0_i32_7 = arith.constant 0 : i32
    %17 = arith.cmpi slt, %10, %c0_i32_7 : i32
    %18 = vector.broadcast %17 : i1 to vector<1x256xi1>
    %19 = vector.broadcast %18 : vector<1x256xi1> to vector<1x256xi1>
    %20 = arith.xori %16, %19 : vector<1x256xi1>
    %21 = arith.andi %20, %14 : vector<1x256xi1>
    %22 = vector.broadcast %10 : i32 to vector<1x256xi32>
    %23 = arith.addi %12, %22 : vector<1x256xi32>
    %24 = arith.select %21, %23, %12 : vector<1x256xi1>, vector<1x256xi32>
    %c0_i32_8 = arith.constant 0 : i32
    %25 = vector.broadcast %c0_i32_8 : i32 to vector<1x256xi32>
    %26 = arith.cmpi eq, %24, %25 : vector<1x256xi32>
    %c127_i32 = arith.constant 127 : i32
    %27 = vector.broadcast %c127_i32 : i32 to vector<1x256xi32>
    %28 = arith.cmpi eq, %24, %27 : vector<1x256xi32>
    %c0_9 = arith.constant 0 : index
    %c0_10 = arith.constant 0 : index
    %29 = vector.load %arg4[%c0_9, %c0_10] : memref<32x12xf32, #tpu.memory_space<vmem>>, vector<32x12xf32>
    %c0_11 = arith.constant 0 : index
    %c0_12 = arith.constant 0 : index
    %30 = vector.load %arg5[%c0_11, %c0_12] : memref<32x1xf32, #tpu.memory_space<vmem>>, vector<32x1xf32>
    %c1_i32_13 = arith.constant 1 : i32
    %31 = tpu.dynamic_rotate %6 by %c1_i32_13 dim 1 : vector<4x256xf32>, i32 -> vector<4x256xf32>
    %cst_14 = arith.constant 0.000000e+00 : f32
    %32 = vector.shape_cast %26 : vector<1x256xi1> to vector<1x256xi1>
    %33 = vector.broadcast %32 : vector<1x256xi1> to vector<4x256xi1>
    %34 = vector.broadcast %cst_14 : f32 to vector<4x256xf32>
    %35 = arith.select %33, %34, %31 : vector<4x256xi1>, vector<4x256xf32>
    %c255_i32 = arith.constant 255 : i32
    %36 = tpu.dynamic_rotate %6 by %c255_i32 dim 1 : vector<4x256xf32>, i32 -> vector<4x256xf32>
    %cst_15 = arith.constant 0.000000e+00 : f32
    %37 = vector.shape_cast %28 : vector<1x256xi1> to vector<1x256xi1>
    %38 = vector.broadcast %37 : vector<1x256xi1> to vector<4x256xi1>
    %39 = vector.broadcast %cst_15 : f32 to vector<4x256xf32>
    %40 = arith.select %38, %39, %36 : vector<4x256xi1>, vector<4x256xf32>
    %41 = tpu.concatenate %35, %6, %40 in 0 : vector<4x256xf32>, vector<4x256xf32>, vector<4x256xf32> -> vector<12x256xf32>
    %cst_16 = arith.constant dense<0.000000e+00> : vector<32x256xf32>
    %42 = tpu.matmul %29, %41, %cst_16 {dimension_numbers = #tpu.dot_dimension_numbers<[1], [0], [0], [1], [0, 0, 1, 1], [], []>} : vector<32x12xf32>, vector<12x256xf32>, vector<32x256xf32> -> vector<32x256xf32>
    %43 = vector.broadcast %30 : vector<32x1xf32> to vector<32x256xf32>
    %44 = arith.addf %42, %43 : vector<32x256xf32>
    %cst_17 = arith.constant 0.000000e+00 : f32
    %45 = vector.broadcast %cst_17 : f32 to vector<32x256xf32>
    %46 = arith.cmpf oge, %44, %45 : vector<32x256xf32>
    %cst_18 = arith.constant 0.00999999977 : f32
    %47 = vector.broadcast %cst_18 : f32 to vector<32x256xf32>
    %48 = arith.mulf %47, %44 : vector<32x256xf32>
    %49 = arith.select %46, %44, %48 : vector<32x256xi1>, vector<32x256xf32>
    %c0_19 = arith.constant 0 : index
    %c0_20 = arith.constant 0 : index
    %50 = vector.load %arg6[%c0_19, %c0_20] : memref<32x96xf32, #tpu.memory_space<vmem>>, vector<32x96xf32>
    %c0_21 = arith.constant 0 : index
    %c0_22 = arith.constant 0 : index
    %51 = vector.load %arg7[%c0_21, %c0_22] : memref<32x1xf32, #tpu.memory_space<vmem>>, vector<32x1xf32>
    %c1_i32_23 = arith.constant 1 : i32
    %52 = tpu.dynamic_rotate %49 by %c1_i32_23 dim 1 : vector<32x256xf32>, i32 -> vector<32x256xf32>
    %cst_24 = arith.constant 0.000000e+00 : f32
    %53 = vector.shape_cast %26 : vector<1x256xi1> to vector<1x256xi1>
    %54 = vector.broadcast %53 : vector<1x256xi1> to vector<32x256xi1>
    %55 = vector.broadcast %cst_24 : f32 to vector<32x256xf32>
    %56 = arith.select %54, %55, %52 : vector<32x256xi1>, vector<32x256xf32>
    %c255_i32_25 = arith.constant 255 : i32
    %57 = tpu.dynamic_rotate %49 by %c255_i32_25 dim 1 : vector<32x256xf32>, i32 -> vector<32x256xf32>
    %cst_26 = arith.constant 0.000000e+00 : f32
    %58 = vector.shape_cast %28 : vector<1x256xi1> to vector<1x256xi1>
    %59 = vector.broadcast %58 : vector<1x256xi1> to vector<32x256xi1>
    %60 = vector.broadcast %cst_26 : f32 to vector<32x256xf32>
    %61 = arith.select %59, %60, %57 : vector<32x256xi1>, vector<32x256xf32>
    %62 = tpu.concatenate %56, %49, %61 in 0 : vector<32x256xf32>, vector<32x256xf32>, vector<32x256xf32> -> vector<96x256xf32>
    %cst_27 = arith.constant dense<0.000000e+00> : vector<32x256xf32>
    %63 = tpu.matmul %50, %62, %cst_27 {dimension_numbers = #tpu.dot_dimension_numbers<[1], [0], [0], [1], [0, 0, 1, 1], [], []>} : vector<32x96xf32>, vector<96x256xf32>, vector<32x256xf32> -> vector<32x256xf32>
    %64 = vector.broadcast %51 : vector<32x1xf32> to vector<32x256xf32>
    %65 = arith.addf %63, %64 : vector<32x256xf32>
    %cst_28 = arith.constant 0.000000e+00 : f32
    %66 = vector.broadcast %cst_28 : f32 to vector<32x256xf32>
    %67 = arith.cmpf oge, %65, %66 : vector<32x256xf32>
    %cst_29 = arith.constant 0.00999999977 : f32
    %68 = vector.broadcast %cst_29 : f32 to vector<32x256xf32>
    %69 = arith.mulf %68, %65 : vector<32x256xf32>
    %70 = arith.select %67, %65, %69 : vector<32x256xi1>, vector<32x256xf32>
    %c0_30 = arith.constant 0 : index
    %c0_31 = arith.constant 0 : index
    %71 = vector.load %arg8[%c0_30, %c0_31] : memref<4x96xf32, #tpu.memory_space<vmem>>, vector<4x96xf32>
    %c0_32 = arith.constant 0 : index
    %c0_33 = arith.constant 0 : index
    %72 = vector.load %arg9[%c0_32, %c0_33] : memref<4x1xf32, #tpu.memory_space<vmem>>, vector<4x1xf32>
    %c1_i32_34 = arith.constant 1 : i32
    %73 = tpu.dynamic_rotate %70 by %c1_i32_34 dim 1 : vector<32x256xf32>, i32 -> vector<32x256xf32>
    %cst_35 = arith.constant 0.000000e+00 : f32
    %74 = vector.shape_cast %26 : vector<1x256xi1> to vector<1x256xi1>
    %75 = vector.broadcast %74 : vector<1x256xi1> to vector<32x256xi1>
    %76 = vector.broadcast %cst_35 : f32 to vector<32x256xf32>
    %77 = arith.select %75, %76, %73 : vector<32x256xi1>, vector<32x256xf32>
    %c255_i32_36 = arith.constant 255 : i32
    %78 = tpu.dynamic_rotate %70 by %c255_i32_36 dim 1 : vector<32x256xf32>, i32 -> vector<32x256xf32>
    %cst_37 = arith.constant 0.000000e+00 : f32
    %79 = vector.shape_cast %28 : vector<1x256xi1> to vector<1x256xi1>
    %80 = vector.broadcast %79 : vector<1x256xi1> to vector<32x256xi1>
    %81 = vector.broadcast %cst_37 : f32 to vector<32x256xf32>
    %82 = arith.select %80, %81, %78 : vector<32x256xi1>, vector<32x256xf32>
    %83 = tpu.concatenate %77, %70, %82 in 0 : vector<32x256xf32>, vector<32x256xf32>, vector<32x256xf32> -> vector<96x256xf32>
    %cst_38 = arith.constant dense<0.000000e+00> : vector<4x256xf32>
    %84 = tpu.matmul %71, %83, %cst_38 {dimension_numbers = #tpu.dot_dimension_numbers<[1], [0], [0], [1], [0, 0, 1, 1], [], []>} : vector<4x96xf32>, vector<96x256xf32>, vector<4x256xf32> -> vector<4x256xf32>
    %85 = vector.broadcast %72 : vector<4x1xf32> to vector<4x256xf32>
    %86 = arith.addf %84, %85 : vector<4x256xf32>
    %c0_39 = arith.constant 0 : index
    %c0_40 = arith.constant 0 : index
    %87 = vector.load %arg10[%c0_39, %c0_40] : memref<4x1xf32, #tpu.memory_space<vmem>>, vector<4x1xf32>
    %88 = vector.broadcast %87 : vector<4x1xf32> to vector<4x256xf32>
    %89 = arith.mulf %86, %88 : vector<4x256xf32>
    %c0_41 = arith.constant 0 : index
    %c0_42 = arith.constant 0 : index
    %90 = vector.load %arg11[%c0_41, %c0_42] : memref<8x256xf32, #tpu.memory_space<vmem>>, vector<4x256xf32>
    tpu.vector_store %arg11[%c0_41, %c0_42], %6 {strides = array<i32>} : memref<8x256xf32, #tpu.memory_space<vmem>>, vector<4x256xf32>,
    %91 = arith.addf %7, %89 : vector<4x256xf32>
    %c4 = arith.constant 4 : index
    %c0_43 = arith.constant 0 : index
    %92 = vector.load %arg11[%c4, %c0_43] : memref<8x256xf32, #tpu.memory_space<vmem>>, vector<4x256xf32>
    tpu.vector_store %arg11[%c4, %c0_43], %91 {strides = array<i32>} : memref<8x256xf32, #tpu.memory_space<vmem>>, vector<4x256xf32>,
    return
  }
  func.func @transform_0(%arg0: i32) -> (i32, i32) {
    %c0_i32 = arith.constant 0 : i32
    %c0_i32_0 = arith.constant 0 : i32
    return %c0_i32, %arg0 : i32, i32
  }
  func.func @transform_1(%arg0: i32) -> (i32, i32) {
    %c0_i32 = arith.constant 0 : i32
    %c0_i32_0 = arith.constant 0 : i32
    %c0_i32_1 = arith.constant 0 : i32
    return %c0_i32, %c0_i32_0 : i32, i32
  }
  func.func @transform_2(%arg0: i32) -> (i32, i32) {
    %c0_i32 = arith.constant 0 : i32
    %c0_i32_0 = arith.constant 0 : i32
    %c0_i32_1 = arith.constant 0 : i32
    return %c0_i32, %c0_i32_0 : i32, i32
  }
  func.func @transform_3(%arg0: i32) -> (i32, i32) {
    %c0_i32 = arith.constant 0 : i32
    %c0_i32_0 = arith.constant 0 : i32
    %c0_i32_1 = arith.constant 0 : i32
    return %c0_i32, %c0_i32_0 : i32, i32
  }
  func.func @transform_4(%arg0: i32) -> (i32, i32) {
    %c0_i32 = arith.constant 0 : i32
    %c0_i32_0 = arith.constant 0 : i32
    %c0_i32_1 = arith.constant 0 : i32
    return %c0_i32, %c0_i32_0 : i32, i32
  }
  func.func @transform_5(%arg0: i32) -> (i32, i32) {
    %c0_i32 = arith.constant 0 : i32
    %c0_i32_0 = arith.constant 0 : i32
    %c0_i32_1 = arith.constant 0 : i32
    return %c0_i32, %c0_i32_0 : i32, i32
  }
  func.func @transform_6(%arg0: i32) -> (i32, i32) {
    %c0_i32 = arith.constant 0 : i32
    %c0_i32_0 = arith.constant 0 : i32
    %c0_i32_1 = arith.constant 0 : i32
    return %c0_i32, %c0_i32_0 : i32, i32
  }
  func.func @transform_7(%arg0: i32) -> (i32, i32) {
    %c0_i32 = arith.constant 0 : i32
    %c0_i32_0 = arith.constant 0 : i32
    %c0_i32_1 = arith.constant 0 : i32
    return %c0_i32, %c0_i32_0 : i32, i32
  }
  func.func @transform_8(%arg0: i32) -> (i32, i32) {
    %c0_i32 = arith.constant 0 : i32
    %c0_i32_0 = arith.constant 0 : i32
    %c0_i32_1 = arith.constant 0 : i32
    return %c0_i32, %c0_i32_0 : i32, i32
  }
  func.func @transform_9(%arg0: i32) -> (i32, i32) {
    %c0_i32 = arith.constant 0 : i32
    %c0_i32_0 = arith.constant 0 : i32
    %c0_i32_1 = arith.constant 0 : i32
    return %c0_i32, %c0_i32_0 : i32, i32
  }
  func.func @transform_10(%arg0: i32) -> (i32, i32) {
    %c0_i32 = arith.constant 0 : i32
    %c0_i32_0 = arith.constant 0 : i32
    return %c0_i32, %arg0 : i32, i32
  }
}

</mosaic_0001>

<llo_original>
// kernel: tpu_custom_call.1
$region0: #{tpu_custom_call.1}
  #allocation0 [shape = 'u32[]', space=smem, size = 0x4, offset = 0x4, fixed_abs, tag = 'smem constant byte address 0x4 - core index']
  #allocation1 [shape = 'u32[144,128]{1,0:T(1,128)}', space=vmem, size = 0x12000, scoped, tag = 'internal scratch']
  %s0 = inlined_call_operand.vmem [shape: f32[8,256], index: 0, kind: input, shape index: {}]
  %s1 = inlined_call_operand.vmem [shape: f32[8,8], index: 1, kind: input, shape index: {}]
  %s2 = inlined_call_operand.vmem [shape: f32[8,1], index: 2, kind: input, shape index: {}]
  %s3 = inlined_call_operand.vmem [shape: f32[32,12], index: 3, kind: input, shape index: {}]
  %s4 = inlined_call_operand.vmem [shape: f32[32,1], index: 4, kind: input, shape index: {}]
  %s5 = inlined_call_operand.vmem [shape: f32[32,96], index: 5, kind: input, shape index: {}]
  %s6 = inlined_call_operand.vmem [shape: f32[32,1], index: 6, kind: input, shape index: {}]
  %s7 = inlined_call_operand.vmem [shape: f32[4,96], index: 7, kind: input, shape index: {}]
  %s8 = inlined_call_operand.vmem [shape: f32[4,1], index: 8, kind: input, shape index: {}]
  %s9 = inlined_call_operand.vmem [shape: f32[4,1], index: 9, kind: input, shape index: {}]
  %s10 = inlined_call_operand.hbm [shape: f32[8,256], index: 10, kind: output, shape index: {}]
  %s11 = sld [smem:[#allocation0]]
  $region50: #{tpu_custom_call.1} parent=0
    _
  %s13 = ssub.s32 1, %s11
  %s14 = scalar_select 0, %s13, %s11
  $region1: #{tpu_custom_call.1} parent=0
    #allocation2 [shape = 'u8[8192]{0}', space=vmem, size = 0x2000, scoped, tag = 'output window, operand 0, single buffered']
    #allocation3 [shape = 's32[1]{0}', space=sflag, size = 0x4, scoped, tag = 'scoped memory for tpu_custom_call.1']
    %15 = vsyncpa [#allocation3], 0
    // Predicated region
    $region2: #{tpu_custom_call.1} parent=1 // pred_check
      _
    $region3: #{tpu_custom_call.1} parent=1 // pred_check_branch
      %17 = sbr.rel (0) target = $region5
    $region4: #{tpu_custom_call.1} parent=1 // pred_region
      _
    $region5: #{tpu_custom_call.1} parent=1 // pred_fallthru
      _
    // Predicated region
    $region6: #{tpu_custom_call.1} parent=1 // pred_check
      _
    $region7: #{tpu_custom_call.1} parent=1 // pred_check_branch
      %19 = sbr.rel (0) target = $region9
    $region8: #{tpu_custom_call.1} parent=1 // pred_region
      _
    $region9: #{tpu_custom_call.1} parent=1 // pred_fallthru
      _
    // Predicated region
    $region10: #{tpu_custom_call.1} parent=1 // pred_check
      _
    $region11: #{tpu_custom_call.1} parent=1 // pred_check_branch
      %21 = sbr.rel (0) target = $region13
    $region12: #{tpu_custom_call.1} parent=1 // pred_region
      _
    $region13: #{tpu_custom_call.1} parent=1 // pred_fallthru
      _
    // Predicated region
    $region14: #{tpu_custom_call.1} parent=1 // pred_check
      _
    $region15: #{tpu_custom_call.1} parent=1 // pred_check_branch
      %23 = sbr.rel (0) target = $region17
    $region16: #{tpu_custom_call.1} parent=1 // pred_region
      _
    $region17: #{tpu_custom_call.1} parent=1 // pred_fallthru
      _
    // Predicated region
    $region18: #{tpu_custom_call.1} parent=1 // pred_check
      _
    $region19: #{tpu_custom_call.1} parent=1 // pred_check_branch
      %25 = sbr.rel (0) target = $region21
    $region20: #{tpu_custom_call.1} parent=1 // pred_region
      _
    $region21: #{tpu_custom_call.1} parent=1 // pred_fallthru
      _
    // Predicated region
    $region22: #{tpu_custom_call.1} parent=1 // pred_check
      _
    $region23: #{tpu_custom_call.1} parent=1 // pred_check_branch
      %27 = sbr.rel (0) target = $region25
    $region24: #{tpu_custom_call.1} parent=1 // pred_region
      _
    $region25: #{tpu_custom_call.1} parent=1 // pred_fallthru
      _
    // Predicated region
    $region26: #{tpu_custom_call.1} parent=1 // pred_check
      _
    $region27: #{tpu_custom_call.1} parent=1 // pred_check_branch
      %29 = sbr.rel (0) target = $region29
    $region28: #{tpu_custom_call.1} parent=1 // pred_region
      _
    $region29: #{tpu_custom_call.1} parent=1 // pred_fallthru
      _
    // Predicated region
    $region30: #{tpu_custom_call.1} parent=1 // pred_check
      _
    $region31: #{tpu_custom_call.1} parent=1 // pred_check_branch
      %31 = sbr.rel (0) target = $region33
    $region32: #{tpu_custom_call.1} parent=1 // pred_region
      _
    $region33: #{tpu_custom_call.1} parent=1 // pred_fallthru
      _
    // Predicated region
    $region34: #{tpu_custom_call.1} parent=1 // pred_check
      _
    $region35: #{tpu_custom_call.1} parent=1 // pred_check_branch
      %33 = sbr.rel (0) target = $region37
    $region36: #{tpu_custom_call.1} parent=1 // pred_region
      _
    $region37: #{tpu_custom_call.1} parent=1 // pred_fallthru
      _
    // Predicated region
    $region38: #{tpu_custom_call.1} parent=1 // pred_check
      _
    $region39: #{tpu_custom_call.1} parent=1 // pred_check_branch
      %35 = sbr.rel (0) target = $region41
    $region40: #{tpu_custom_call.1} parent=1 // pred_region
      _
    $region41: #{tpu_custom_call.1} parent=1 // pred_fallthru
      _
    %v36 = vld [vmem:[%s0] sm:$0xff]
    %v37 = vld [vmem:[%s0 + $0x8] sm:$0xff]
    %v38 = vld [vmem:[%s1] sm:$0xff]
    %v39 = vld [vmem:[%s2] sm:$0xff]
    %41 = vset.pattern.permute.xlu0 0
    %42 = vperm.xlu0 %41, %v39
    %v43 = vpop.permute.xlu0 %42
    %vm45 = vcmask 64512
    %v47 = vsel %vm45, %v38, 0
    %49 = vmatprep.subr.mxu0 %v37
    %50 = vmatpush1.msra.mxu0 %v36
    %51 = vmatprep.subr.mxu0 0.0
    %52 = vmatpush1.msra.mxu0 0.0
    %53 = vmatprep.subr.mxu0 0.0
    %54 = vmatpush1.msra.mxu0 0.0
    %55 = vmatprep.subr.mxu0 0.0
    %56 = vmatpush1.msra.mxu0 0.0
    %57 = vmatprep.subr.mxu0 0.0
    %58 = vmatpush1.msra.mxu0 0.0
    %59 = vmatprep.subr.mxu0 0.0
    %60 = vmatpush1.msra.mxu0 0.0
    %61 = vmatprep.subr.mxu0 0.0
    %62 = vmatpush1.msra.mxu0 0.0
    %63 = vmatprep.subr.mxu0 0.0
    %64 = vmatpush1.msra.mxu0 0.0
    %65 = vmatprep.subr.mxu0 0.0
    %66 = vmatpush1.msra.mxu0 0.0
    %67 = vmatprep.subr.mxu0 0.0
    %68 = vmatpush1.msra.mxu0 0.0
    %69 = vmatprep.subr.mxu0 0.0
    %70 = vmatpush1.msra.mxu0 0.0
    %71 = vmatprep.subr.mxu0 0.0
    %72 = vmatpush1.msra.mxu0 0.0
    %73 = vmatprep.subr.mxu0 0.0
    %74 = vmatpush1.msra.mxu0 0.0
    %75 = vmatprep.subr.mxu0 0.0
    %76 = vmatpush1.msra.mxu0 0.0
    %77 = vmatprep.subr.mxu0 0.0
    %78 = vmatpush1.msra.mxu0 0.0
    %79 = vmatprep.subr.mxu0 0.0
    %80 = vmatpush1.msra.mxu0 0.0
    %81 = vmatprep.subr.mxu0 0.0
    %82 = vmatpush1.msra.mxu0 0.0
    %83 = vmatprep.subr.mxu0 0.0
    %84 = vmatpush1.msra.mxu0 0.0
    %85 = vmatprep.subr.mxu0 0.0
    %86 = vmatpush1.msra.mxu0 0.0
    %87 = vmatprep.subr.mxu0 0.0
    %88 = vmatpush1.msra.mxu0 0.0
    %89 = vmatprep.subr.mxu0 0.0
    %90 = vmatpush1.msra.mxu0 0.0
    %91 = vmatprep.subr.mxu0 0.0
    %92 = vmatpush1.msra.mxu0 0.0
    %93 = vmatprep.subr.mxu0 0.0
    %94 = vmatpush1.msra.mxu0 0.0
    %95 = vmatprep.subr.mxu0 0.0
    %96 = vmatpush1.msra.mxu0 0.0
    %97 = vmatprep.subr.mxu0 0.0
    %98 = vmatpush1.msra.mxu0 0.0
    %99 = vmatprep.subr.mxu0 0.0
    %100 = vmatpush1.msra.mxu0 0.0
    %101 = vmatprep.subr.mxu0 0.0
    %102 = vmatpush1.msra.mxu0 0.0
    %103 = vmatprep.subr.mxu0 0.0
    %104 = vmatpush1.msra.mxu0 0.0
    %105 = vmatprep.subr.mxu0 0.0
    %106 = vmatpush1.msra.mxu0 0.0
    %107 = vmatprep.subr.mxu0 0.0
    %108 = vmatpush1.msra.mxu0 0.0
    %109 = vmatprep.subr.mxu0 0.0
    %110 = vmatpush1.msra.mxu0 0.0
    %111 = vmatprep.subr.mxu0 0.0
    %112 = vmatpush1.msra.mxu0 0.0
    %113 = vmatprep.mubr.f32.mxu0 0.0
    %114 = vmatmul.mubr.f32.gmra.mrb[0].mxu0 %v47
    %v115 = vpop.f32.mrb[0].mxu0
    %v116 = vadd.f32 %v43, %v115
    %v117 = vpop.f32.mrb[0].mxu0
    %v118 = vadd.f32 %v43, %v117
    %119 = vdwg.mxu0
    %v120 = vlaneseq
    %v121 = vand.u32 %v120, 127
    %v122 = vadd.s32 %v121, 128
    %vm123 = vcmp.lt.s32.totalorder %v121, 0
    %v124 = vsub.s32 0, %v121
    %v125 = vsel %vm123, %v124, %v121
    %v126 = vshrl.u32 %v125, 7
    %v127 = vand.u32 %v125, 127
    %v128 = vsub.s32 0, %v127
    %v129 = vsel %vm123, %v128, %v127
    %vm130 = vcmp.lt.s32.totalorder %v122, 0
    %v131 = vsub.s32 0, %v122
    %v132 = vsel %vm130, %v131, %v122
    %v133 = vshrl.u32 %v132, 7
    %v134 = vand.u32 %v132, 127
    %v135 = vsub.s32 0, %v134
    %v136 = vsel %vm130, %v135, %v134
    %vm137 = vcmp.ne.s32.totalorder %v129, 0
    %vm138 = vcmp.ne.s32.totalorder %v136, 0
    %vm139 = vcmp.lt.s32.totalorder %v129, 0
    %vm140 = vcmp.lt.s32.totalorder %v136, 0
    %vm141 = vmand %vm139, %vm137
    %vm142 = vmand %vm140, %vm138
    %v143 = vadd.s32 %v129, 128
    %v144 = vadd.s32 %v136, 128
    %v145 = vsel %vm141, %v143, %v129
    %v146 = vsel %vm142, %v144, %v136
    %vm147 = vcmp.eq.s32.totalorder %v145, 0
    %vm148 = vcmp.eq.s32.totalorder %v146, 0
    %vm149 = vcmp.eq.s32.totalorder %v145, 127
    %vm150 = vcmp.eq.s32.totalorder %v146, 127
    %v151 = vld [vmem:[%s3] sm:$0xff]
    %v152 = vld [vmem:[%s3 + $0x8] sm:$0xff]
    %v153 = vld [vmem:[%s3 + $0x10] sm:$0xff]
    %v154 = vld [vmem:[%s3 + $0x18] sm:$0xff]
    %v155 = vld [vmem:[%s4] sm:$0xff]
    %v156 = vld [vmem:[%s4 + $0x8] sm:$0xff]
    %v157 = vld [vmem:[%s4 + $0x10] sm:$0xff]
    %v158 = vld [vmem:[%s4 + $0x18] sm:$0xff]
    %159 = vrot.lane.b32.xlu0 %v116, 1
    %v160 = vpop.permute.xlu0 %159
    %161 = vrot.lane.b32.xlu0 %v118, 1
    %v162 = vpop.permute.xlu0 %161
    %vm163 = vcmp.lt.s32.totalorder %v121, 1
    %v164 = vsel %vm163, %v160, %v162
    %v165 = vsel %vm163, %v162, %v160
    %v166 = vsel %vm147, 1, 0
    %v167 = vsel %vm148, 1, 0
    %vm168 = vcmp.eq.s32.totalorder %v166, 1
    %vm169 = vcmp.eq.s32.totalorder %v167, 1
    %v170 = vsel %vm168, 0.0, %v165
    %v171 = vsel %vm169, 0.0, %v164
    %172 = vrot.lane.b32.xlu0 %v116, 127
    %v173 = vpop.permute.xlu0 %172
    %174 = vrot.lane.b32.xlu0 %v118, 127
    %v175 = vpop.permute.xlu0 %174
    %vm176 = vcmp.lt.s32.totalorder %v121, 127
    %v177 = vsel %vm176, %v173, %v175
    %v178 = vsel %vm176, %v175, %v173
    %v179 = vsel %vm149, 1, 0
    %v180 = vsel %vm150, 1, 0
    %vm181 = vcmp.eq.s32.totalorder %v179, 1
    %vm182 = vcmp.eq.s32.totalorder %v180, 1
    %v183 = vsel %vm181, 0.0, %v177
    %v184 = vsel %vm182, 0.0, %v178
    %v187 = vrot.slane %v116, 4
    %v188 = vrot.slane %v118, 4
    %vm191 = vcmask 1043456
    %v192 = vsel %vm191, %v170, %v187
    %v193 = vsel %vm191, %v171, %v188
    %195 = vset.pattern.permute.xlu0 0
    %196 = vperm.xlu0 %195, %v155
    %v197 = vpop.permute.xlu0 %196
    %200 = vset.pattern.permute.xlu0 0
    %201 = vperm.xlu0 %200, %v156
    %v202 = vpop.permute.xlu0 %201
    %205 = vset.pattern.permute.xlu0 0
    %206 = vperm.xlu0 %205, %v157
    %v207 = vpop.permute.xlu0 %206
    %210 = vset.pattern.permute.xlu0 0
    %211 = vperm.xlu0 %210, %v158
    %v212 = vpop.permute.xlu0 %211
    %vm214 = vcmask 97280
    %v216 = vsel %vm214, %v151, 0
    %v219 = vsel %vm214, %v152, 0
    %v222 = vsel %vm214, %v153, 0
    %v225 = vsel %vm214, %v154, 0
    %v228 = vsel %vm191, %v183, 0
    %v231 = vsel %vm191, %v184, 0
    %233 = vmatprep.subr.mxu0 %v193
    %234 = vmatpush1.msra.mxu0 %v192
    %235 = vmatprep.subr.mxu0 %v231
    %236 = vmatpush1.msra.mxu0 %v228
    %237 = vmatprep.subr.mxu0 0.0
    %238 = vmatpush1.msra.mxu0 0.0
    %239 = vmatprep.subr.mxu0 0.0
    %240 = vmatpush1.msra.mxu0 0.0
    %241 = vmatprep.subr.mxu0 0.0
    %242 = vmatpush1.msra.mxu0 0.0
    %243 = vmatprep.subr.mxu0 0.0
    %244 = vmatpush1.msra.mxu0 0.0
    %245 = vmatprep.subr.mxu0 0.0
    %246 = vmatpush1.msra.mxu0 0.0
    %247 = vmatprep.subr.mxu0 0.0
    %248 = vmatpush1.msra.mxu0 0.0
    %249 = vmatprep.subr.mxu0 0.0
    %250 = vmatpush1.msra.mxu0 0.0
    %251 = vmatprep.subr.mxu0 0.0
    %252 = vmatpush1.msra.mxu0 0.0
    %253 = vmatprep.subr.mxu0 0.0
    %254 = vmatpush1.msra.mxu0 0.0
    %255 = vmatprep.subr.mxu0 0.0
    %256 = vmatpush1.msra.mxu0 0.0
    %257 = vmatprep.subr.mxu0 0.0
    %258 = vmatpush1.msra.mxu0 0.0
    %259 = vmatprep.subr.mxu0 0.0
    %260 = vmatpush1.msra.mxu0 0.0
    %261 = vmatprep.subr.mxu0 0.0
    %262 = vmatpush1.msra.mxu0 0.0
    %263 = vmatprep.subr.mxu0 0.0
    %264 = vmatpush1.msra.mxu0 0.0
    %265 = vmatprep.subr.mxu0 0.0
    %266 = vmatpush1.msra.mxu0 0.0
    %267 = vmatprep.subr.mxu0 0.0
    %268 = vmatpush1.msra.mxu0 0.0
    %269 = vmatprep.subr.mxu0 0.0
    %270 = vmatpush1.msra.mxu0 0.0
    %271 = vmatprep.subr.mxu0 0.0
    %272 = vmatpush1.msra.mxu0 0.0
    %273 = vmatprep.subr.mxu0 0.0
    %274 = vmatpush1.msra.mxu0 0.0
    %275 = vmatprep.subr.mxu0 0.0
    %276 = vmatpush1.msra.mxu0 0.0
    %277 = vmatprep.subr.mxu0 0.0
    %278 = vmatpush1.msra.mxu0 0.0
    %279 = vmatprep.subr.mxu0 0.0
    %280 = vmatpush1.msra.mxu0 0.0
    %281 = vmatprep.subr.mxu0 0.0
    %282 = vmatpush1.msra.mxu0 0.0
    %283 = vmatprep.subr.mxu0 0.0
    %284 = vmatpush1.msra.mxu0 0.0
    %285 = vmatprep.subr.mxu0 0.0
    %286 = vmatpush1.msra.mxu0 0.0
    %287 = vmatprep.subr.mxu0 0.0
    %288 = vmatpush1.msra.mxu0 0.0
    %289 = vmatprep.subr.mxu0 0.0
    %290 = vmatpush1.msra.mxu0 0.0
    %291 = vmatprep.subr.mxu0 0.0
    %292 = vmatpush1.msra.mxu0 0.0
    %293 = vmatprep.subr.mxu0 0.0
    %294 = vmatpush1.msra.mxu0 0.0
    %295 = vmatprep.subr.mxu0 0.0
    %296 = vmatpush1.msra.mxu0 0.0
    %297 = vmatprep.mubr.f32.mxu0 0.0
    %298 = vmatmul.mubr.f32.gmra.mrb[0].mxu0 %v216
    %v299 = vpop.f32.mrb[0].mxu0
    %v300 = vadd.f32 %v197, %v299
    %v301 = vpop.f32.mrb[0].mxu0
    %v302 = vadd.f32 %v197, %v301
    %303 = vmatprep.mubr.f32.mxu0 0.0
    %304 = vmatmul.mubr.f32.gmra.mrb[0].mxu0 %v219
    %v305 = vpop.f32.mrb[0].mxu0
    %v306 = vadd.f32 %v202, %v305
    %v307 = vpop.f32.mrb[0].mxu0
    %v308 = vadd.f32 %v202, %v307
    %309 = vmatprep.mubr.f32.mxu0 0.0
    %310 = vmatmul.mubr.f32.gmra.mrb[0].mxu0 %v222
    %v311 = vpop.f32.mrb[0].mxu0
    %v312 = vadd.f32 %v207, %v311
    %v313 = vpop.f32.mrb[0].mxu0
    %v314 = vadd.f32 %v207, %v313
    %315 = vmatprep.mubr.f32.mxu0 0.0
    %316 = vmatmul.mubr.f32.gmra.mrb[0].mxu0 %v225
    %v317 = vpop.f32.mrb[0].mxu0
    %v318 = vadd.f32 %v212, %v317
    %v319 = vpop.f32.mrb[0].mxu0
    %v320 = vadd.f32 %v212, %v319
    %321 = vdwg.mxu0
    %vm322 = vcmp.ge.f32.partialorder %v300, 0.0
    %vm323 = vcmp.ge.f32.partialorder %v302, 0.0
    %vm324 = vcmp.ge.f32.partialorder %v306, 0.0
    %vm325 = vcmp.ge.f32.partialorder %v308, 0.0
    %vm326 = vcmp.ge.f32.partialorder %v312, 0.0
    %vm327 = vcmp.ge.f32.partialorder %v314, 0.0
    %vm328 = vcmp.ge.f32.partialorder %v318, 0.0
    %vm329 = vcmp.ge.f32.partialorder %v320, 0.0
    %v330 = vmul.f32 %v300, 0.01
    %v331 = vmul.f32 %v302, 0.01
    %v332 = vmul.f32 %v306, 0.01
    %v333 = vmul.f32 %v308, 0.01
    %v334 = vmul.f32 %v312, 0.01
    %v335 = vmul.f32 %v314, 0.01
    %v336 = vmul.f32 %v318, 0.01
    %v337 = vmul.f32 %v320, 0.01
    %v338 = vsel %vm322, %v300, %v330
    %v339 = vsel %vm323, %v302, %v331
    %v340 = vsel %vm324, %v306, %v332
    %v341 = vsel %vm325, %v308, %v333
    %v342 = vsel %vm326, %v312, %v334
    %v343 = vsel %vm327, %v314, %v335
    %v344 = vsel %vm328, %v318, %v336
    %v345 = vsel %vm329, %v320, %v337
    %v346 = vld [vmem:[%s5] sm:$0xff]
    %v347 = vld [vmem:[%s5 + $0x8] sm:$0xff]
    %v348 = vld [vmem:[%s5 + $0x10] sm:$0xff]
    %v349 = vld [vmem:[%s5 + $0x18] sm:$0xff]
    %v350 = vld [vmem:[%s6] sm:$0xff]
    %v351 = vld [vmem:[%s6 + $0x8] sm:$0xff]
    %v352 = vld [vmem:[%s6 + $0x10] sm:$0xff]
    %v353 = vld [vmem:[%s6 + $0x18] sm:$0xff]
    %354 = vrot.lane.b32.xlu0 %v338, 1
    %v355 = vpop.permute.xlu0 %354
    %356 = vrot.lane.b32.xlu0 %v340, 1
    %v357 = vpop.permute.xlu0 %356
    %358 = vrot.lane.b32.xlu0 %v342, 1
    %v359 = vpop.permute.xlu0 %358
    %360 = vrot.lane.b32.xlu0 %v344, 1
    %v361 = vpop.permute.xlu0 %360
    %362 = vrot.lane.b32.xlu0 %v339, 1
    %v363 = vpop.permute.xlu0 %362
    %364 = vrot.lane.b32.xlu0 %v341, 1
    %v365 = vpop.permute.xlu0 %364
    %366 = vrot.lane.b32.xlu0 %v343, 1
    %v367 = vpop.permute.xlu0 %366
    %368 = vrot.lane.b32.xlu0 %v345, 1
    %v369 = vpop.permute.xlu0 %368
    %v370 = vsel %vm163, %v355, %v363
    %v371 = vsel %vm163, %v357, %v365
    %v372 = vsel %vm163, %v359, %v367
    %v373 = vsel %vm163, %v361, %v369
    %v374 = vsel %vm163, %v363, %v355
    %v375 = vsel %vm163, %v365, %v357
    %v376 = vsel %vm163, %v367, %v359
    %v377 = vsel %vm163, %v369, %v361
    %v378 = vsel %vm168, 0.0, %v374
    %v379 = vsel %vm169, 0.0, %v370
    %v380 = vsel %vm168, 0.0, %v375
    %v381 = vsel %vm169, 0.0, %v371
    %v382 = vsel %vm168, 0.0, %v376
    %v383 = vsel %vm169, 0.0, %v372
    %v384 = vsel %vm168, 0.0, %v377
    %v385 = vsel %vm169, 0.0, %v373
    %386 = vrot.lane.b32.xlu0 %v338, 127
    %v387 = vpop.permute.xlu0 %386
    %388 = vrot.lane.b32.xlu0 %v340, 127
    %v389 = vpop.permute.xlu0 %388
    %390 = vrot.lane.b32.xlu0 %v342, 127
    %v391 = vpop.permute.xlu0 %390
    %392 = vrot.lane.b32.xlu0 %v344, 127
    %v393 = vpop.permute.xlu0 %392
    %394 = vrot.lane.b32.xlu0 %v339, 127
    %v395 = vpop.permute.xlu0 %394
    %396 = vrot.lane.b32.xlu0 %v341, 127
    %v397 = vpop.permute.xlu0 %396
    %398 = vrot.lane.b32.xlu0 %v343, 127
    %v399 = vpop.permute.xlu0 %398
    %400 = vrot.lane.b32.xlu0 %v345, 127
    %v401 = vpop.permute.xlu0 %400
    %v402 = vsel %vm176, %v387, %v395
    %v403 = vsel %vm176, %v389, %v397
    %v404 = vsel %vm176, %v391, %v399
    %v405 = vsel %vm176, %v393, %v401
    %v406 = vsel %vm176, %v395, %v387
    %v407 = vsel %vm176, %v397, %v389
    %v408 = vsel %vm176, %v399, %v391
    %v409 = vsel %vm176, %v401, %v393
    %v410 = vsel %vm181, 0.0, %v402
    %v411 = vsel %vm182, 0.0, %v406
    %v412 = vsel %vm181, 0.0, %v403
    %v413 = vsel %vm182, 0.0, %v407
    %v414 = vsel %vm181, 0.0, %v404
    %v415 = vsel %vm182, 0.0, %v408
    %v416 = vsel %vm181, 0.0, %v405
    %v417 = vsel %vm182, 0.0, %v409
    %419 = vset.pattern.permute.xlu0 0
    %420 = vperm.xlu0 %419, %v350
    %v421 = vpop.permute.xlu0 %420
    %424 = vset.pattern.permute.xlu0 0
    %425 = vperm.xlu0 %424, %v351
    %v426 = vpop.permute.xlu0 %425
    %429 = vset.pattern.permute.xlu0 0
    %430 = vperm.xlu0 %429, %v352
    %v431 = vpop.permute.xlu0 %430
    %434 = vset.pattern.permute.xlu0 0
    %435 = vperm.xlu0 %434, %v353
    %v436 = vpop.permute.xlu0 %435
    %vm438 = vcmask 785408
    %v440 = vsel %vm438, %v346, 0
    %v443 = vsel %vm438, %v347, 0
    %v446 = vsel %vm438, %v348, 0
    %v449 = vsel %vm438, %v349, 0
    %451 = vmatprep.subr.mxu0 %v379
    %452 = vmatpush1.msra.mxu0 %v378
    %453 = vmatprep.subr.mxu0 %v381
    %454 = vmatpush1.msra.mxu0 %v380
    %455 = vmatprep.subr.mxu0 %v383
    %456 = vmatpush1.msra.mxu0 %v382
    %457 = vmatprep.subr.mxu0 %v385
    %458 = vmatpush1.msra.mxu0 %v384
    %459 = vmatprep.subr.mxu0 %v339
    %460 = vmatpush1.msra.mxu0 %v338
    %461 = vmatprep.subr.mxu0 %v341
    %462 = vmatpush1.msra.mxu0 %v340
    %463 = vmatprep.subr.mxu0 %v343
    %464 = vmatpush1.msra.mxu0 %v342
    %465 = vmatprep.subr.mxu0 %v345
    %466 = vmatpush1.msra.mxu0 %v344
    %467 = vmatprep.subr.mxu0 %v411
    %468 = vmatpush1.msra.mxu0 %v410
    %469 = vmatprep.subr.mxu0 %v413
    %470 = vmatpush1.msra.mxu0 %v412
    %471 = vmatprep.subr.mxu0 %v415
    %472 = vmatpush1.msra.mxu0 %v414
    %473 = vmatprep.subr.mxu0 %v417
    %474 = vmatpush1.msra.mxu0 %v416
    %475 = vmatprep.subr.mxu0 0.0
    %476 = vmatpush1.msra.mxu0 0.0
    %477 = vmatprep.subr.mxu0 0.0
    %478 = vmatpush1.msra.mxu0 0.0
    %479 = vmatprep.subr.mxu0 0.0
    %480 = vmatpush1.msra.mxu0 0.0
    %481 = vmatprep.subr.mxu0 0.0
    %482 = vmatpush1.msra.mxu0 0.0
    %483 = vmatprep.subr.mxu0 0.0
    %484 = vmatpush1.msra.mxu0 0.0
    %485 = vmatprep.subr.mxu0 0.0
    %486 = vmatpush1.msra.mxu0 0.0
    %487 = vmatprep.subr.mxu0 0.0
    %488 = vmatpush1.msra.mxu0 0.0
    %489 = vmatprep.subr.mxu0 0.0
    %490 = vmatpush1.msra.mxu0 0.0
    %491 = vmatprep.subr.mxu0 0.0
    %492 = vmatpush1.msra.mxu0 0.0
    %493 = vmatprep.subr.mxu0 0.0
    %494 = vmatpush1.msra.mxu0 0.0
    %495 = vmatprep.subr.mxu0 0.0
    %496 = vmatpush1.msra.mxu0 0.0
    %497 = vmatprep.subr.mxu0 0.0
    %498 = vmatpush1.msra.mxu0 0.0
    %499 = vmatprep.subr.mxu0 0.0
    %500 = vmatpush1.msra.mxu0 0.0
    %501 = vmatprep.subr.mxu0 0.0
    %502 = vmatpush1.msra.mxu0 0.0
    %503 = vmatprep.subr.mxu0 0.0
    %504 = vmatpush1.msra.mxu0 0.0
    %505 = vmatprep.subr.mxu0 0.0
    %506 = vmatpush1.msra.mxu0 0.0
    %507 = vmatprep.subr.mxu0 0.0
    %508 = vmatpush1.msra.mxu0 0.0
    %509 = vmatprep.subr.mxu0 0.0
    %510 = vmatpush1.msra.mxu0 0.0
    %511 = vmatprep.subr.mxu0 0.0
    %512 = vmatpush1.msra.mxu0 0.0
    %513 = vmatprep.subr.mxu0 0.0
    %514 = vmatpush1.msra.mxu0 0.0
    %515 = vmatprep.mubr.f32.mxu0 0.0
    %516 = vmatmul.mubr.f32.gmra.mrb[0].mxu0 %v440
    %v517 = vpop.f32.mrb[0].mxu0
    %v518 = vadd.f32 %v421, %v517
    %v519 = vpop.f32.mrb[0].mxu0
    %v520 = vadd.f32 %v421, %v519
    %521 = vmatprep.mubr.f32.mxu0 0.0
    %522 = vmatmul.mubr.f32.gmra.mrb[0].mxu0 %v443
    %v523 = vpop.f32.mrb[0].mxu0
    %v524 = vadd.f32 %v426, %v523
    %v525 = vpop.f32.mrb[0].mxu0
    %v526 = vadd.f32 %v426, %v525
    %527 = vmatprep.mubr.f32.mxu0 0.0
    %528 = vmatmul.mubr.f32.gmra.mrb[0].mxu0 %v446
    %v529 = vpop.f32.mrb[0].mxu0
    %v530 = vadd.f32 %v431, %v529
    %v531 = vpop.f32.mrb[0].mxu0
    %v532 = vadd.f32 %v431, %v531
    %533 = vmatprep.mubr.f32.mxu0 0.0
    %534 = vmatmul.mubr.f32.gmra.mrb[0].mxu0 %v449
    %v535 = vpop.f32.mrb[0].mxu0
    %v536 = vadd.f32 %v436, %v535
    %v537 = vpop.f32.mrb[0].mxu0
    %v538 = vadd.f32 %v436, %v537
    %539 = vdwg.mxu0
    %vm540 = vcmp.ge.f32.partialorder %v518, 0.0
    %vm541 = vcmp.ge.f32.partialorder %v520, 0.0
    %vm542 = vcmp.ge.f32.partialorder %v524, 0.0
    %vm543 = vcmp.ge.f32.partialorder %v526, 0.0
    %vm544 = vcmp.ge.f32.partialorder %v530, 0.0
    %vm545 = vcmp.ge.f32.partialorder %v532, 0.0
    %vm546 = vcmp.ge.f32.partialorder %v536, 0.0
    %vm547 = vcmp.ge.f32.partialorder %v538, 0.0
    %v548 = vmul.f32 %v518, 0.01
    %v549 = vmul.f32 %v520, 0.01
    %v550 = vmul.f32 %v524, 0.01
    %v551 = vmul.f32 %v526, 0.01
    %v552 = vmul.f32 %v530, 0.01
    %v553 = vmul.f32 %v532, 0.01
    %v554 = vmul.f32 %v536, 0.01
    %v555 = vmul.f32 %v538, 0.01
    %v556 = vsel %vm540, %v518, %v548
    %v557 = vsel %vm541, %v520, %v549
    %v558 = vsel %vm542, %v524, %v550
    %v559 = vsel %vm543, %v526, %v551
    %v560 = vsel %vm544, %v530, %v552
    %v561 = vsel %vm545, %v532, %v553
    %v562 = vsel %vm546, %v536, %v554
    %v563 = vsel %vm547, %v538, %v555
    %v564 = vld [vmem:[%s7] sm:$0xf]
    %v565 = vld [vmem:[%s8] sm:$0xf]
    %566 = vrot.lane.b32.xlu0 %v556, 1
    %v567 = vpop.permute.xlu0 %566
    %568 = vrot.lane.b32.xlu0 %v558, 1
    %v569 = vpop.permute.xlu0 %568
    %570 = vrot.lane.b32.xlu0 %v560, 1
    %v571 = vpop.permute.xlu0 %570
    %572 = vrot.lane.b32.xlu0 %v562, 1
    %v573 = vpop.permute.xlu0 %572
    %574 = vrot.lane.b32.xlu0 %v557, 1
    %v575 = vpop.permute.xlu0 %574
    %576 = vrot.lane.b32.xlu0 %v559, 1
    %v577 = vpop.permute.xlu0 %576
    %578 = vrot.lane.b32.xlu0 %v561, 1
    %v579 = vpop.permute.xlu0 %578
    %580 = vrot.lane.b32.xlu0 %v563, 1
    %v581 = vpop.permute.xlu0 %580
    %v582 = vsel %vm163, %v567, %v575
    %v583 = vsel %vm163, %v569, %v577
    %v584 = vsel %vm163, %v571, %v579
    %v585 = vsel %vm163, %v573, %v581
    %v586 = vsel %vm163, %v575, %v567
    %v587 = vsel %vm163, %v577, %v569
    %v588 = vsel %vm163, %v579, %v571
    %v589 = vsel %vm163, %v581, %v573
    %v590 = vsel %vm168, 0.0, %v586
    %v591 = vsel %vm169, 0.0, %v582
    %v592 = vsel %vm168, 0.0, %v587
    %v593 = vsel %vm169, 0.0, %v583
    %v594 = vsel %vm168, 0.0, %v588
    %v595 = vsel %vm169, 0.0, %v584
    %v596 = vsel %vm168, 0.0, %v589
    %v597 = vsel %vm169, 0.0, %v585
    %598 = vrot.lane.b32.xlu0 %v556, 127
    %v599 = vpop.permute.xlu0 %598
    %600 = vrot.lane.b32.xlu0 %v558, 127
    %v601 = vpop.permute.xlu0 %600
    %602 = vrot.lane.b32.xlu0 %v560, 127
    %v603 = vpop.permute.xlu0 %602
    %604 = vrot.lane.b32.xlu0 %v562, 127
    %v605 = vpop.permute.xlu0 %604
    %606 = vrot.lane.b32.xlu0 %v557, 127
    %v607 = vpop.permute.xlu0 %606
    %608 = vrot.lane.b32.xlu0 %v559, 127
    %v609 = vpop.permute.xlu0 %608
    %610 = vrot.lane.b32.xlu0 %v561, 127
    %v611 = vpop.permute.xlu0 %610
    %612 = vrot.lane.b32.xlu0 %v563, 127
    %v613 = vpop.permute.xlu0 %612
    %v614 = vsel %vm176, %v599, %v607
    %v615 = vsel %vm176, %v601, %v609
    %v616 = vsel %vm176, %v603, %v611
    %v617 = vsel %vm176, %v605, %v613
    %v618 = vsel %vm176, %v607, %v599
    %v619 = vsel %vm176, %v609, %v601
    %v620 = vsel %vm176, %v611, %v603
    %v621 = vsel %vm176, %v613, %v605
    %v622 = vsel %vm181, 0.0, %v614
    %v623 = vsel %vm182, 0.0, %v618
    %v624 = vsel %vm181, 0.0, %v615
    %v625 = vsel %vm182, 0.0, %v619
    %v626 = vsel %vm181, 0.0, %v616
    %v627 = vsel %vm182, 0.0, %v620
    %v628 = vsel %vm181, 0.0, %v617
    %v629 = vsel %vm182, 0.0, %v621
    %631 = vset.pattern.permute.xlu0 0
    %632 = vperm.xlu0 %631, %v565
    %v633 = vpop.permute.xlu0 %632
    %v636 = vsel %vm438, %v564, 0
    %638 = vmatprep.subr.mxu0 %v591
    %639 = vmatpush1.msra.mxu0 %v590
    %640 = vmatprep.subr.mxu0 %v593
    %641 = vmatpush1.msra.mxu0 %v592
    %642 = vmatprep.subr.mxu0 %v595
    %643 = vmatpush1.msra.mxu0 %v594
    %644 = vmatprep.subr.mxu0 %v597
    %645 = vmatpush1.msra.mxu0 %v596
    %646 = vmatprep.subr.mxu0 %v557
    %647 = vmatpush1.msra.mxu0 %v556
    %648 = vmatprep.subr.mxu0 %v559
    %649 = vmatpush1.msra.mxu0 %v558
    %650 = vmatprep.subr.mxu0 %v561
    %651 = vmatpush1.msra.mxu0 %v560
    %652 = vmatprep.subr.mxu0 %v563
    %653 = vmatpush1.msra.mxu0 %v562
    %654 = vmatprep.subr.mxu0 %v623
    %655 = vmatpush1.msra.mxu0 %v622
    %656 = vmatprep.subr.mxu0 %v625
    %657 = vmatpush1.msra.mxu0 %v624
    %658 = vmatprep.subr.mxu0 %v627
    %659 = vmatpush1.msra.mxu0 %v626
    %660 = vmatprep.subr.mxu0 %v629
    %661 = vmatpush1.msra.mxu0 %v628
    %662 = vmatprep.subr.mxu0 0.0
    %663 = vmatpush1.msra.mxu0 0.0
    %664 = vmatprep.subr.mxu0 0.0
    %665 = vmatpush1.msra.mxu0 0.0
    %666 = vmatprep.subr.mxu0 0.0
    %667 = vmatpush1.msra.mxu0 0.0
    %668 = vmatprep.subr.mxu0 0.0
    %669 = vmatpush1.msra.mxu0 0.0
    %670 = vmatprep.subr.mxu0 0.0
    %671 = vmatpush1.msra.mxu0 0.0
    %672 = vmatprep.subr.mxu0 0.0
    %673 = vmatpush1.msra.mxu0 0.0
    %674 = vmatprep.subr.mxu0 0.0
    %675 = vmatpush1.msra.mxu0 0.0
    %676 = vmatprep.subr.mxu0 0.0
    %677 = vmatpush1.msra.mxu0 0.0
    %678 = vmatprep.subr.mxu0 0.0
    %679 = vmatpush1.msra.mxu0 0.0
    %680 = vmatprep.subr.mxu0 0.0
    %681 = vmatpush1.msra.mxu0 0.0
    %682 = vmatprep.subr.mxu0 0.0
    %683 = vmatpush1.msra.mxu0 0.0
    %684 = vmatprep.subr.mxu0 0.0
    %685 = vmatpush1.msra.mxu0 0.0
    %686 = vmatprep.subr.mxu0 0.0
    %687 = vmatpush1.msra.mxu0 0.0
    %688 = vmatprep.subr.mxu0 0.0
    %689 = vmatpush1.msra.mxu0 0.0
    %690 = vmatprep.subr.mxu0 0.0
    %691 = vmatpush1.msra.mxu0 0.0
    %692 = vmatprep.subr.mxu0 0.0
    %693 = vmatpush1.msra.mxu0 0.0
    %694 = vmatprep.subr.mxu0 0.0
    %695 = vmatpush1.msra.mxu0 0.0
    %696 = vmatprep.subr.mxu0 0.0
    %697 = vmatpush1.msra.mxu0 0.0
    %698 = vmatprep.subr.mxu0 0.0
    %699 = vmatpush1.msra.mxu0 0.0
    %700 = vmatprep.subr.mxu0 0.0
    %701 = vmatpush1.msra.mxu0 0.0
    %702 = vmatprep.mubr.f32.mxu0 0.0
    %703 = vmatmul.mubr.f32.gmra.mrb[0].mxu0 %v636
    %v704 = vpop.f32.mrb[0].mxu0
    %v705 = vadd.f32 %v633, %v704
    %v706 = vpop.f32.mrb[0].mxu0
    %v707 = vadd.f32 %v633, %v706
    %708 = vdwg.mxu0
    %v709 = vld [vmem:[%s9] sm:$0xf]
    %711 = vset.pattern.permute.xlu0 0
    %712 = vperm.xlu0 %711, %v709
    %v713 = vpop.permute.xlu0 %712
    %v715 = vmul.f32 %v705, %v713
    %v716 = vmul.f32 %v707, %v713
    %717 = vst [vmem:[#allocation2] sm:$0xf] %v116
    %718 = vst [vmem:[#allocation2 + $0x8] sm:$0xf] %v118
    %v721 = vrot.slane %v715, 4
    %v722 = vrot.slane %v716, 4
    %v725 = vadd.f32 %v116, %v721
    %v726 = vadd.f32 %v118, %v722
    %727 = vst [vmem:[#allocation2] sm:$0xf0] %v725
    %728 = vst [vmem:[#allocation2 + $0x8] sm:$0xf0] %v726
    // Predicated region
    $region42: #{tpu_custom_call.1} parent=1 // pred_check
      _
    $region43: #{tpu_custom_call.1} parent=1 // pred_check_branch
      %730 = sbr.rel (0) target = $region45
    $region44: #{tpu_custom_call.1} parent=1 // pred_region
      %s732 = ssub.s32 256, 256
      %733 = vsyncadd [#allocation3], %s732
      %s735 = sshll.u32 [#allocation2], 4
      %s736 = int_to_ptr.vmem [resolvable:$true] %s735
      %738 = dma.vmem_to_hbm [thread:$0]  %s736, 256, %s10, [#allocation3]
    $region45: #{tpu_custom_call.1} parent=1 // pred_fallthru
      _
    // Predicated region
    $region46: #{tpu_custom_call.1} parent=1 // pred_check
      _
    $region47: #{tpu_custom_call.1} parent=1 // pred_check_branch
      %740 = sbr.rel (0) target = $region49
    $region48: #{tpu_custom_call.1} parent=1 // pred_region
      %741 = dma.done [#allocation3], 256
    $region49: #{tpu_custom_call.1} parent=1 // pred_fallthru
      _
    %742 = vsyncpa [#allocation3], 1

</llo_original>
